<compile_context>
chip_gen: v7x
topology: tpu7x:2x2x1
jax: 0.10.0
libtpu: 0.0.40
codegen_flags: <defaults>
</compile_context>

<pallas_src>
import math

import jax
import jax.numpy as jnp
from jax.experimental import pallas as pl
from jax.experimental.pallas import tpu as pltpu

_LANE = 128
_SUBLANE = 8

# Target bytes for one feats block (amortizes per-grid-step overhead; 1-4 MiB sweet
# spot on v5e/v6e/v7x for memory-bound kernels).
_TARGET_BLOCK_BYTES = 2 * 1024 * 1024

# Conservative total-residency budget that fits every generation's default scoped
# VMEM (v5e default 16 MiB, v6e 32 MiB, v7x 32 MiB of 64 MiB physical).
_VMEM_BUDGET_BYTES = 12 * 1024 * 1024


def _round_up(x, m):
    return (x + m - 1) // m * m


def _charge_skip_kernel(q_ref, w_ref, f_ref, o_ref):
    # q_ref: [TN, C_in]  charges tile
    # w_ref: [C_in, H]   full weight (already includes e3nn 1/sqrt(fan_in) scale);
    #                    constant index_map -> effectively VMEM-resident
    # f_ref: [TN, H]     previous node-feature tile
    # o_ref: [TN, H]     output tile (boundary rows masked on store by Pallas)
    c_in = q_ref.shape[1]
    acc = f_ref[...].astype(jnp.float32)
    if c_in <= 8:
        # Tiny contraction: MXU would pad K to 128/256 (>96% zeros) and pay
        # push/pop latency.  A short unrolled broadcast-FMA rides the VALU
        # slots, which have huge slack in this memory-bound kernel.
        q = q_ref[...].astype(jnp.float32)
        w = w_ref[...].astype(jnp.float32)
        for c in range(c_in):  # c_in is static -> fully unrolled
            acc = acc + q[:, c:c + 1] * w[c:c + 1, :]
    else:
        acc = acc + jnp.dot(q_ref[...], w_ref[...],
                            preferred_element_type=jnp.float32)
    o_ref[...] = acc.astype(o_ref.dtype)


def charge_skip_connection(charges, weight, node_features):
    """out = node_features + charges @ weight (weight pre-scaled like e3nn Linear).

    charges:       [N, C_in]
    weight:        [C_in, H]
    node_features: [N, H]   (output keeps this dtype; accumulation is f32)
    """
    N, C_in = charges.shape
    C_w, H = weight.shape
    assert C_w == C_in
    assert node_features.shape == (N, H)

    feat_dtype = node_features.dtype
    f_itemsize = jnp.dtype(feat_dtype).itemsize
    q_itemsize = jnp.dtype(charges.dtype).itemsize
    w_itemsize = jnp.dtype(weight.dtype).itemsize

    # Lane-padded widths: what the blocks actually occupy in VMEM.
    H_lanes = _round_up(H, _LANE)
    C_lanes = _round_up(C_in, _LANE)

    # Byte-targeted row tile (multiple of the sublane count).
    tile_n = max(_SUBLANE, _TARGET_BLOCK_BYTES // (H_lanes * f_itemsize))

    # VMEM residency per row of tile: 2 input + 2 output feats buffers plus 2
    # lane-padded charges buffers (double-buffered BlockSpec pipeline).
    per_row_bytes = 4 * H_lanes * f_itemsize + 2 * C_lanes * q_itemsize
    rows_cap = max(_SUBLANE, _VMEM_BUDGET_BYTES // per_row_bytes)
    tile_n = min(tile_n, rows_cap)

    # Give the row axis >= 2 grid steps when possible (dual-TC v7x; also keeps the
    # software pipeline busy).
    half_rows = _round_up(-(-N // 2), _SUBLANE)
    tile_n = min(tile_n, max(_SUBLANE, half_rows))
    tile_n = max(_SUBLANE, (tile_n // _SUBLANE) * _SUBLANE)

    grid = (pl.cdiv(N, tile_n),)

    # Explicit scoped-VMEM limit from the actual residency (+ weight buffers),
    # with headroom; safe on all generations (>= 64 MiB physical VMEM).
    w_bytes = 2 * _round_up(C_in, _SUBLANE) * H_lanes * w_itemsize
    vmem_needed = tile_n * per_row_bytes + w_bytes
    vmem_limit = int(min(32 * 1024 * 1024,
                         max(16 * 1024 * 1024, 2 * vmem_needed)))

    cost = pl.CostEstimate(
        flops=2 * N * C_in * H,
        transcendentals=0,
        bytes_accessed=(N * C_in * q_itemsize
                        + C_in * H * w_itemsize
                        + 2 * N * H * f_itemsize),
    )

    out = pl.pallas_call(
        _charge_skip_kernel,
        out_shape=jax.ShapeDtypeStruct((N, H), feat_dtype),
        grid_spec=pltpu.PrefetchScalarGridSpec(
            num_scalar_prefetch=0,
            grid=grid,
            in_specs=[
                pl.BlockSpec((tile_n, C_in), lambda i: (i, 0)),  # charges tile
                pl.BlockSpec((C_in, H), lambda i: (0, 0)),       # full weight
                pl.BlockSpec((tile_n, H), lambda i: (i, 0)),     # prev features tile
            ],
            out_specs=pl.BlockSpec((tile_n, H), lambda i: (i, 0)),
        ),
        compiler_params=pltpu.CompilerParams(
            dimension_semantics=("parallel",),
            vmem_limit_bytes=vmem_limit,
        ),
        cost_estimate=cost,
    )(charges, weight, node_features)

    return out


if __name__ == "__main__":
    # Small synthetic shapes consistent with the module:
    #   N    = 20 atoms (not a multiple of the tile -> exercises the ragged block)
    #   C_IN = 4 scalar charge channels    (irreps_in[CHARGES_KEY]   ~ "4x0e")
    #   H    = 32 hidden feature channels  (irreps_in[NODE_FEATURES] ~ "32x0e")
    N, C_IN, H = 20, 4, 32

    key = jax.random.PRNGKey(0)
    k_q, k_f, k_w = jax.random.split(key, 3)

    charges = jax.random.normal(k_q, (N, C_IN), dtype=jnp.float32)
    node_features = jax.random.normal(k_f, (N, H), dtype=jnp.float32)

    # Deterministic e3nn-style Linear weights: standard-normal init, output
    # normalized by 1/sqrt(fan_in), no bias.  Folded into the weight so the
    # kernel is a plain matmul.
    raw_w = jax.random.normal(k_w, (C_IN, H), dtype=jnp.float32)
    weight = raw_w / math.sqrt(C_IN)

    out = charge_skip_connection(charges, weight, node_features)
    out = jax.block_until_ready(out)

    # Reference check (plain JAX).
    ref = node_features + charges @ weight
    assert out.shape == (N, H)
    assert out.dtype == node_features.dtype
    assert jnp.allclose(out, ref, atol=1e-5, rtol=1e-5)

    print("KERNEL_OK")
</pallas_src>

<mosaic_0001>
module attributes {stable_mosaic.version = 11 : i64} {
  func.func @_charge_skip_kernel(%arg0: i32, %arg1: memref<16x4xf32, #tpu.memory_space<vmem>>, %arg2: memref<4x32xf32, #tpu.memory_space<vmem>>, %arg3: memref<16x32xf32, #tpu.memory_space<vmem>>, %arg4: memref<16x32xf32, #tpu.memory_space<vmem>>) attributes {dimension_semantics = [#tpu.dimension_semantics<parallel>], iteration_bounds = array<i64: 2>, scalar_prefetch = 0 : i64, scratch_operands = 0 : i64, tpu.core_type = #tpu.core_type<tc>, window_params = [{transform_indices = @transform_0, window_bounds = array<i64: 16, 4>}, {pipeline_mode = #tpu.pipeline_mode<synchronous>, transform_indices = @transform_1, window_bounds = array<i64: 4, 32>}, {transform_indices = @transform_2, window_bounds = array<i64: 16, 32>}, {transform_indices = @transform_3, window_bounds = array<i64: 16, 32>}]} {
    %c0 = arith.constant 0 : index
    %c0_0 = arith.constant 0 : index
    %0 = vector.load %arg3[%c0, %c0_0] : memref<16x32xf32, #tpu.memory_space<vmem>>, vector<16x32xf32>
    %c0_1 = arith.constant 0 : index
    %c0_2 = arith.constant 0 : index
    %1 = vector.load %arg1[%c0_1, %c0_2] : memref<16x4xf32, #tpu.memory_space<vmem>>, vector<16x4xf32>
    %c0_3 = arith.constant 0 : index
    %c0_4 = arith.constant 0 : index
    %2 = vector.load %arg2[%c0_3, %c0_4] : memref<4x32xf32, #tpu.memory_space<vmem>>, vector<4x32xf32>
    %3 = vector.extract_strided_slice %1 {offsets = [0, 0], sizes = [16, 1], strides = [1, 1]} : vector<16x4xf32> to vector<16x1xf32>
    %4 = vector.extract_strided_slice %2 {offsets = [0, 0], sizes = [1, 32], strides = [1, 1]} : vector<4x32xf32> to vector<1x32xf32>
    %5 = vector.broadcast %3 : vector<16x1xf32> to vector<16x32xf32>
    %6 = vector.broadcast %4 : vector<1x32xf32> to vector<16x32xf32>
    %7 = arith.mulf %5, %6 : vector<16x32xf32>
    %8 = arith.addf %0, %7 : vector<16x32xf32>
    %9 = vector.extract_strided_slice %1 {offsets = [0, 1], sizes = [16, 1], strides = [1, 1]} : vector<16x4xf32> to vector<16x1xf32>
    %10 = vector.extract_strided_slice %2 {offsets = [1, 0], sizes = [1, 32], strides = [1, 1]} : vector<4x32xf32> to vector<1x32xf32>
    %11 = vector.broadcast %9 : vector<16x1xf32> to vector<16x32xf32>
    %12 = vector.broadcast %10 : vector<1x32xf32> to vector<16x32xf32>
    %13 = arith.mulf %11, %12 : vector<16x32xf32>
    %14 = arith.addf %8, %13 : vector<16x32xf32>
    %15 = vector.extract_strided_slice %1 {offsets = [0, 2], sizes = [16, 1], strides = [1, 1]} : vector<16x4xf32> to vector<16x1xf32>
    %16 = vector.extract_strided_slice %2 {offsets = [2, 0], sizes = [1, 32], strides = [1, 1]} : vector<4x32xf32> to vector<1x32xf32>
    %17 = vector.broadcast %15 : vector<16x1xf32> to vector<16x32xf32>
    %18 = vector.broadcast %16 : vector<1x32xf32> to vector<16x32xf32>
    %19 = arith.mulf %17, %18 : vector<16x32xf32>
    %20 = arith.addf %14, %19 : vector<16x32xf32>
    %21 = vector.extract_strided_slice %1 {offsets = [0, 3], sizes = [16, 1], strides = [1, 1]} : vector<16x4xf32> to vector<16x1xf32>
    %22 = vector.extract_strided_slice %2 {offsets = [3, 0], sizes = [1, 32], strides = [1, 1]} : vector<4x32xf32> to vector<1x32xf32>
    %23 = vector.broadcast %21 : vector<16x1xf32> to vector<16x32xf32>
    %24 = vector.broadcast %22 : vector<1x32xf32> to vector<16x32xf32>
    %25 = arith.mulf %23, %24 : vector<16x32xf32>
    %26 = arith.addf %20, %25 : vector<16x32xf32>
    %c0_5 = arith.constant 0 : index
    %c0_6 = arith.constant 0 : index
    %27 = vector.load %arg4[%c0_5, %c0_6] : memref<16x32xf32, #tpu.memory_space<vmem>>, vector<16x32xf32>
    tpu.vector_store %arg4[%c0_5, %c0_6], %26 {strides = array<i32>} : memref<16x32xf32, #tpu.memory_space<vmem>>, vector<16x32xf32>,
    return
  }
  func.func @transform_0(%arg0: i32) -> (i32, i32) {
    %c0_i32 = arith.constant 0 : i32
    %c0_i32_0 = arith.constant 0 : i32
    return %arg0, %c0_i32 : i32, i32
  }
  func.func @transform_1(%arg0: i32) -> (i32, i32) {
    %c0_i32 = arith.constant 0 : i32
    %c0_i32_0 = arith.constant 0 : i32
    %c0_i32_1 = arith.constant 0 : i32
    return %c0_i32, %c0_i32_0 : i32, i32
  }
  func.func @transform_2(%arg0: i32) -> (i32, i32) {
    %c0_i32 = arith.constant 0 : i32
    %c0_i32_0 = arith.constant 0 : i32
    return %arg0, %c0_i32 : i32, i32
  }
  func.func @transform_3(%arg0: i32) -> (i32, i32) {
    %c0_i32 = arith.constant 0 : i32
    %c0_i32_0 = arith.constant 0 : i32
    return %arg0, %c0_i32 : i32, i32
  }
}

</mosaic_0001>

<llo_original>
// kernel: tpu_custom_call.1
$region0: #{tpu_custom_call.1}
  #allocation0 [shape = 'u32[]', space=smem, size = 0x4, offset = 0x4, fixed_abs, tag = 'smem constant byte address 0x4 - core index']
  #allocation1 [shape = 'u32[144,128]{1,0:T(1,128)}', space=vmem, size = 0x12000, scoped, tag = 'internal scratch']
  %s0 = inlined_call_operand.vmem [shape: f32[20,4], index: 0, kind: input, shape index: {}]
  %s1 = inlined_call_operand.vmem [shape: f32[4,32], index: 1, kind: input, shape index: {}]
  %s2 = inlined_call_operand.vmem [shape: f32[20,32], index: 2, kind: input, shape index: {}]
  %s3 = inlined_call_operand.hbm [shape: f32[20,32], index: 3, kind: output, shape index: {}]
  %s4 = sld [smem:[#allocation0]]
  $region45: #{tpu_custom_call.1} parent=0
    _
  %s6 = ssub.s32 1, %s4
  %s7 = scalar_select 0, %s6, %s4
  $region1: #{tpu_custom_call.1} parent=0
    #allocation2 [shape = 'u8[16384]{0}', space=vmem, size = 0x4000, scoped, tag = 'output window, operand 0']
    #allocation3 [shape = 's32[2]{0}', space=sflag, size = 0x8, scoped, tag = 'scoped memory for tpu_custom_call.1']
    %8 = vsyncpa [#allocation3], 0
    %s9 = scalar_lea.sflag [#allocation3], 1
    %10 = vsyncpa %s9, 0
    loop: start=0, step=1, limit=4
    $region2: #{tpu_custom_call.1} parent=1 // loop_pre_header
      _
    $region3: #{tpu_custom_call.1} parent=1 // loop_header
      %s12 = sphi 0, %s16
      %p13 = scmp.ge.s32.totalorder %s12, 4
      %s22 = sphi 0, %s24
      %s25 = sphi 0, %s22
      %s26 = sphi 0, %s25
      %s42 = sphi 0, %s26
      %s46 = sphi 0, %s46
      %s48 = sphi 0, %s46
      %s49 = sphi 0, %s48
      %s63 = sphi 0, %s49
      %s69 = sphi 0, %s71
      %s72 = sphi 0, %s69
      %s73 = sphi 0, %s72
      %s89 = sphi 0, %s73
      %s95 = sphi 0, %s97
      %s98 = sphi 0, %s95
      %s99 = sphi 0, %s98
      %s115 = sphi 0, %s99
    $region4: #{tpu_custom_call.1} parent=1 // loop_header_branch
      %15 = sbr.rel (%p13) target = $region8
    $region5: #{tpu_custom_call.1} parent=1 // loop_body
      %s17 = ssub.s32 %s12, 1
      %s18 = ssub.s32 %s12, 2
      %s19 = sadd.s32 %s12, 1
      %s20 = ssub.s32 %s12, %s19
      %p21 = scmp.eq.s32.totalorder %s20, 0
      %s23 = sadd.s32 %s22, 1
      %s24 = scalar_select %p21, %s22, %s23
      %p27 = pneg %p21
      %p28 = scmp.eq.s32.totalorder %s12, 1
      %p29 = por %p27, %p28
      %p30 = scmp.ne.s32.totalorder %s22, %s25
      %p31 = scmp.eq.s32.totalorder %s12, 0
      %p32 = por %p30, %p31
      %p33 = scmp.ne.s32.totalorder %s22, %s25
      %p34 = scmp.eq.s32.totalorder %s17, 1
      %p35 = por %p33, %p34
      %p36 = scmp.ne.s32.totalorder %s25, %s26
      %p37 = scmp.eq.s32.totalorder %s17, 0
      %p38 = por %p36, %p37
      %p39 = scmp.ne.s32.totalorder %s25, %s26
      %p40 = scmp.eq.s32.totalorder %s18, 1
      %p41 = por %p39, %p40
      %p43 = scmp.ne.s32.totalorder %s26, %s42
      %p44 = scmp.eq.s32.totalorder %s18, 0
      %p45 = por %p43, %p44
      %s47 = sadd.s32 %s46, 1
      %p50 = scmp.eq.s32.totalorder %s12, 1
      %p51 = scmp.ne.s32.totalorder %s46, %s48
      %p52 = scmp.eq.s32.totalorder %s12, 0
      %p53 = por %p51, %p52
      %p54 = scmp.ne.s32.totalorder %s46, %s48
      %p55 = scmp.eq.s32.totalorder %s17, 1
      %p56 = por %p54, %p55
      %p57 = scmp.ne.s32.totalorder %s48, %s49
      %p58 = scmp.eq.s32.totalorder %s17, 0
      %p59 = por %p57, %p58
      %p60 = scmp.ne.s32.totalorder %s48, %s49
      %p61 = scmp.eq.s32.totalorder %s18, 1
      %p62 = por %p60, %p61
      %p64 = scmp.ne.s32.totalorder %s49, %s63
      %p65 = scmp.eq.s32.totalorder %s18, 0
      %p66 = por %p64, %p65
      %s67 = ssub.s32 %s12, %s19
      %p68 = scmp.eq.s32.totalorder %s67, 0
      %s70 = sadd.s32 %s69, 1
      %s71 = scalar_select %p68, %s69, %s70
      %p74 = pneg %p68
      %p75 = scmp.eq.s32.totalorder %s12, 1
      %p76 = por %p74, %p75
      %p77 = scmp.ne.s32.totalorder %s69, %s72
      %p78 = scmp.eq.s32.totalorder %s12, 0
      %p79 = por %p77, %p78
      %p80 = scmp.ne.s32.totalorder %s69, %s72
      %p81 = scmp.eq.s32.totalorder %s17, 1
      %p82 = por %p80, %p81
      %p83 = scmp.ne.s32.totalorder %s72, %s73
      %p84 = scmp.eq.s32.totalorder %s17, 0
      %p85 = por %p83, %p84
      %p86 = scmp.ne.s32.totalorder %s72, %s73
      %p87 = scmp.eq.s32.totalorder %s18, 1
      %p88 = por %p86, %p87
      %p90 = scmp.ne.s32.totalorder %s73, %s89
      %p91 = scmp.eq.s32.totalorder %s18, 0
      %p92 = por %p90, %p91
      %s93 = ssub.s32 %s12, %s19
      %p94 = scmp.eq.s32.totalorder %s93, 0
      %s96 = sadd.s32 %s95, 1
      %s97 = scalar_select %p94, %s95, %s96
      %p100 = pneg %p94
      %p101 = scmp.eq.s32.totalorder %s12, 1
      %p102 = por %p100, %p101
      %p103 = scmp.ne.s32.totalorder %s95, %s98
      %p104 = scmp.eq.s32.totalorder %s12, 0
      %p105 = por %p103, %p104
      %p106 = scmp.ne.s32.totalorder %s95, %s98
      %p107 = scmp.eq.s32.totalorder %s17, 1
      %p108 = por %p106, %p107
      %p109 = scmp.ne.s32.totalorder %s98, %s99
      %p110 = scmp.eq.s32.totalorder %s17, 0
      %p111 = por %p109, %p110
      %p112 = scmp.ne.s32.totalorder %s98, %s99
      %p113 = scmp.eq.s32.totalorder %s18, 1
      %p114 = por %p112, %p113
      %p116 = scmp.ne.s32.totalorder %s99, %s115
      %p117 = scmp.eq.s32.totalorder %s18, 0
      %p118 = por %p116, %p117
      %p119 = scmp.le.s32.totalorder 1, %s12
      %p120 = scmp.lt.s32.totalorder %s12, 3
      %p121 = pnand %p119, %p120
      %p122 = pneg %p121
      // Predicated region
      $region9: #{tpu_custom_call.1} parent=5 // pred_check
        _
      $region10: #{tpu_custom_call.1} parent=5 // pred_check_branch
        %124 = sbr.rel (%p121) target = $region12
      $region11: #{tpu_custom_call.1} parent=5 // pred_region
        %s125 = ssub.s32 %s12, 1
        // Predicated region
        $region13: #{tpu_custom_call.1} parent=11 // pred_check
          %p126 = pneg %p59
        $region14: #{tpu_custom_call.1} parent=11 // pred_check_branch
          %128 = sbr.rel (%p126) target = $region16
        $region15: #{tpu_custom_call.1} parent=11 // pred_region
          _
        $region16: #{tpu_custom_call.1} parent=11 // pred_fallthru
          _
      $region12: #{tpu_custom_call.1} parent=5 // pred_fallthru
        _
      %p129 = scmp.lt.s32.totalorder %s12, 2
      // Predicated region
      $region17: #{tpu_custom_call.1} parent=5 // pred_check
        %p130 = pneg %p129
      $region18: #{tpu_custom_call.1} parent=5 // pred_check_branch
        %132 = sbr.rel (%p130) target = $region20
      $region19: #{tpu_custom_call.1} parent=5 // pred_region
        // Predicated region
        $region21: #{tpu_custom_call.1} parent=19 // pred_check
          %p133 = pneg %p32
        $region22: #{tpu_custom_call.1} parent=19 // pred_check_branch
          %135 = sbr.rel (%p133) target = $region24
        $region23: #{tpu_custom_call.1} parent=19 // pred_region
          %s136 = smul.u32 2, %s12
          %s137 = ssub.s32 3, %s136
          %p138 = scmp.lt.s32.totalorder %s137, 2
          %s139 = scalar_select %p138, %s137, 2
          %s140 = smul.u32 128, %s139
          %p141 = scmp.lt.s32.totalorder %s136, 2
          %s142 = scalar_select %p141, %s136, 2
          %s143 = smul.addr %s142, 8
          %s144 = scalar_lea.vmem %s0, %s143
          %s145 = smul.u32 2, %s12
          %s146 = ssub.s32 3, %s145
          %p147 = scmp.lt.s32.totalorder %s146, 2
          %s148 = scalar_select %p147, %s146, 2
          %s149 = smul.u32 128, %s148
        $region24: #{tpu_custom_call.1} parent=19 // pred_fallthru
          _
        // Predicated region
        $region25: #{tpu_custom_call.1} parent=19 // pred_check
          %p150 = pneg %p79
        $region26: #{tpu_custom_call.1} parent=19 // pred_check_branch
          %152 = sbr.rel (%p150) target = $region28
        $region27: #{tpu_custom_call.1} parent=19 // pred_region
          %s153 = smul.u32 2, %s12
          %s154 = ssub.s32 3, %s153
          %p155 = scmp.lt.s32.totalorder %s154, 2
          %s156 = scalar_select %p155, %s154, 2
          %s157 = smul.u32 128, %s156
          %p158 = scmp.lt.s32.totalorder %s153, 2
          %s159 = scalar_select %p158, %s153, 2
          %s160 = smul.addr %s159, 8
          %s161 = scalar_lea.vmem %s2, %s160
          %s162 = smul.u32 2, %s12
          %s163 = ssub.s32 3, %s162
          %p164 = scmp.lt.s32.totalorder %s163, 2
          %s165 = scalar_select %p164, %s163, 2
          %s166 = smul.u32 128, %s165
        $region28: #{tpu_custom_call.1} parent=19 // pred_fallthru
          _
      $region20: #{tpu_custom_call.1} parent=5 // pred_fallthru
        _
      %p167 = scmp.le.s32.totalorder 1, %s12
      %p168 = scmp.lt.s32.totalorder %s12, 3
      %p169 = pnand %p167, %p168
      %p170 = pneg %p169
      // Predicated region
      $region29: #{tpu_custom_call.1} parent=5 // pred_check
        _
      $region30: #{tpu_custom_call.1} parent=5 // pred_check_branch
        %172 = sbr.rel (%p169) target = $region32
      $region31: #{tpu_custom_call.1} parent=5 // pred_region
        %s173 = ssub.s32 %s12, 1
        %s174 = smul.u32 2, %s17
        %s175 = ssub.s32 3, %s174
        %p176 = scmp.lt.s32.totalorder %s175, 2
        %s177 = scalar_select %p176, %s175, 2
        %s178 = smul.u32 128, %s177
        %p179 = scmp.lt.s32.totalorder %s174, 2
        %s180 = scalar_select %p179, %s174, 2
        %s181 = smul.addr %s180, 8
        %s182 = scalar_lea.vmem %s0, %s181
        %p183 = pneg %p38
        %p184 = pneg %p35
        %p185 = pneg %p59
        %p186 = pneg %p56
        %s187 = smul.u32 2, %s17
        %s188 = ssub.s32 3, %s187
        %p189 = scmp.lt.s32.totalorder %s188, 2
        %s190 = scalar_select %p189, %s188, 2
        %s191 = smul.u32 128, %s190
        %p192 = scmp.lt.s32.totalorder %s187, 2
        %s193 = scalar_select %p192, %s187, 2
        %s194 = smul.addr %s193, 8
        %s195 = scalar_lea.vmem %s2, %s194
        %p196 = pneg %p85
        %p197 = pneg %p82
        %p198 = pneg %p111
        %p199 = pneg %p108
        %s200 = sand.u32 %s98, 1
        %s201 = scalar_lea.sflag [#allocation3], %s200
        %s202 = sand.u32 %s98, 1
        %s203 = smul.addr %s202, 16
        %s204 = scalar_lea.vmem [#allocation2], %s203
        %s205 = smul.u32 2, %s17
        %s206 = ssub.s32 3, %s205
        %p207 = scmp.lt.s32.totalorder %s206, 2
        %s208 = scalar_select %p207, %s206, 2
        %s209 = smul.u32 128, %s208
        %p210 = scmp.lt.s32.totalorder %s205, 2
        %s211 = scalar_select %p210, %s205, 2
        %s212 = smul.addr %s211, 8
        %s213 = scalar_lea.vmem %s0, %s212
        %s214 = smul.u32 2, %s17
        %s215 = ssub.s32 3, %s214
        %p216 = scmp.lt.s32.totalorder %s215, 2
        %s217 = scalar_select %p216, %s215, 2
        %s218 = smul.u32 128, %s217
        %s219 = smul.u32 2, %s17
        %s220 = ssub.s32 3, %s219
        %p221 = scmp.lt.s32.totalorder %s220, 2
        %s222 = scalar_select %p221, %s220, 2
        %s223 = smul.u32 128, %s222
        %p224 = scmp.lt.s32.totalorder %s219, 2
        %s225 = scalar_select %p224, %s219, 2
        %s226 = smul.addr %s225, 8
        %s227 = scalar_lea.vmem %s2, %s226
        %s228 = smul.u32 2, %s17
        %s229 = ssub.s32 3, %s228
        %p230 = scmp.lt.s32.totalorder %s229, 2
        %s231 = scalar_select %p230, %s229, 2
        %s232 = smul.u32 128, %s231
        %s233 = smul.u32 2, %s17
        %s234 = ssub.s32 3, %s233
        %p235 = scmp.lt.s32.totalorder %s234, 2
        %s236 = scalar_select %p235, %s234, 2
        %s237 = smul.u32 128, %s236
        %v238 = vld [vmem:[%s227] sm:$0xff]
        %v239 = vld [vmem:[%s227 + $0x8] sm:$0xff]
        %v240 = vld [vmem:[%s213] sm:$0xff]
        %v241 = vld [vmem:[%s213 + $0x8] sm:$0xff]
        %v242 = vld [vmem:[%s1] sm:$0xf]
        %244 = vset.pattern.permute.xlu0 0
        %245 = vperm.xlu0 %244, %v240
        %v246 = vpop.permute.xlu0 %245
        %249 = vset.pattern.permute.xlu0 0
        %250 = vperm.xlu0 %249, %v241
        %v251 = vpop.permute.xlu0 %250
        %v253 = vlaneseq
        %v254 = vshrl.u32 %v253, 7
        %v255 = vsub.s32 0, %v254
        %v256 = vrot.slane %v242, %v255
        %v257 = vmul.f32 %v246, %v256
        %v258 = vmul.f32 %v251, %v256
        %v259 = vadd.f32 %v238, %v257
        %v260 = vadd.f32 %v239, %v258
        %261 = vset.pattern.permute.xlu0 1
        %262 = vperm.xlu0 %261, %v240
        %v263 = vpop.permute.xlu0 %262
        %265 = vset.pattern.permute.xlu0 1
        %266 = vperm.xlu0 %265, %v241
        %v267 = vpop.permute.xlu0 %266
        %v269 = vlaneseq
        %v270 = vshrl.u32 %v269, 7
        %v271 = vsub.s32 1, %v270
        %v272 = vrot.slane %v242, %v271
        %v273 = vmul.f32 %v263, %v272
        %v274 = vmul.f32 %v267, %v272
        %v275 = vadd.f32 %v259, %v273
        %v276 = vadd.f32 %v260, %v274
        %277 = vset.pattern.permute.xlu0 2
        %278 = vperm.xlu0 %277, %v240
        %v279 = vpop.permute.xlu0 %278
        %281 = vset.pattern.permute.xlu0 2
        %282 = vperm.xlu0 %281, %v241
        %v283 = vpop.permute.xlu0 %282
        %v285 = vlaneseq
        %v286 = vshrl.u32 %v285, 7
        %v287 = vsub.s32 2, %v286
        %v288 = vrot.slane %v242, %v287
        %v289 = vmul.f32 %v279, %v288
        %v290 = vmul.f32 %v283, %v288
        %v291 = vadd.f32 %v275, %v289
        %v292 = vadd.f32 %v276, %v290
        %293 = vset.pattern.permute.xlu0 3
        %294 = vperm.xlu0 %293, %v240
        %v295 = vpop.permute.xlu0 %294
        %297 = vset.pattern.permute.xlu0 3
        %298 = vperm.xlu0 %297, %v241
        %v299 = vpop.permute.xlu0 %298
        %v301 = vlaneseq
        %v302 = vshrl.u32 %v301, 7
        %v303 = vsub.s32 3, %v302
        %v304 = vrot.slane %v242, %v303
        %v305 = vmul.f32 %v295, %v304
        %v306 = vmul.f32 %v299, %v304
        %v307 = vadd.f32 %v291, %v305
        %v308 = vadd.f32 %v292, %v306
        %vm309 = vcmask 261120
        %310 = vst.msk [vmem:[%s204] sm:$0xff] %vm309, %v307
        %311 = vst.msk [vmem:[%s204 + $0x8] sm:$0xff] %vm309, %v308
        %s312 = sand.u32 %s98, 1
        %s313 = scalar_lea.sflag [#allocation3], %s312
        %s314 = sand.u32 %s98, 1
        %s315 = smul.addr %s314, 16
        %s316 = scalar_lea.vmem [#allocation2], %s315
        // Predicated region
        $region33: #{tpu_custom_call.1} parent=31 // pred_check
          %p317 = pneg %p108
        $region34: #{tpu_custom_call.1} parent=31 // pred_check_branch
          %319 = sbr.rel (%p317) target = $region36
        $region35: #{tpu_custom_call.1} parent=31 // pred_region
          %s320 = smul.u32 2, %s17
          %s321 = ssub.s32 3, %s320
          %p322 = scmp.lt.s32.totalorder %s321, 2
          %s323 = scalar_select %p322, %s321, 2
          %s324 = smul.u32 128, %s323
          %s326 = ssub.s32 256, %s324
          %327 = vsyncadd %s313, %s326
          %p328 = scmp.ne.s32.totalorder 0, %s324
          %s329 = smul.addr %s320, 128
          %s330 = scalar_lea.hbm %s3, %s329
          %s331 = smul.u32 8, %s323
          %s332 = sshll.u32 %s316, 4
          %s333 = int_to_ptr.vmem [resolvable:$true] %s332
          %s334 = sshll.u32 %s331, 4
          %338 = dma.vmem_to_hbm [thread:$0]  (%p328), %s333, %s334, %s330, %s313, 128, 128, 8
        $region36: #{tpu_custom_call.1} parent=31 // pred_fallthru
          _
      $region32: #{tpu_custom_call.1} parent=5 // pred_fallthru
        _
      %p339 = scmp.le.s32.totalorder 2, %s12
      // Predicated region
      $region37: #{tpu_custom_call.1} parent=5 // pred_check
        %p340 = pneg %p339
      $region38: #{tpu_custom_call.1} parent=5 // pred_check_branch
        %342 = sbr.rel (%p340) target = $region40
      $region39: #{tpu_custom_call.1} parent=5 // pred_region
        %s343 = ssub.s32 %s12, 2
        // Predicated region
        $region41: #{tpu_custom_call.1} parent=39 // pred_check
          %p344 = pneg %p114
        $region42: #{tpu_custom_call.1} parent=39 // pred_check_branch
          %346 = sbr.rel (%p344) target = $region44
        $region43: #{tpu_custom_call.1} parent=39 // pred_region
          %s347 = sand.u32 %s99, 1
          %s348 = scalar_lea.sflag [#allocation3], %s347
          %s349 = sand.u32 %s99, 1
          %s350 = smul.addr %s349, 16
          %s351 = scalar_lea.vmem [#allocation2], %s350
          %352 = dma.done %s348, 256
        $region44: #{tpu_custom_call.1} parent=39 // pred_fallthru
          _
      $region40: #{tpu_custom_call.1} parent=5 // pred_fallthru
        _
    $region6: #{tpu_custom_call.1} parent=1 // loop_footer
      %s16 = sadd.s32 1, %s12
    $region7: #{tpu_custom_call.1} parent=1 // loop_footer_branch
      %11 = sbr.rel target = $region3
    $region8: #{tpu_custom_call.1} parent=1 // loop_exit
      _
    %353 = vsyncpa [#allocation3], 1
    %s354 = scalar_lea.sflag [#allocation3], 1
    %355 = vsyncpa %s354, 1

</llo_original>
